<compile_context>
chip_gen: v5e
topology: v5e:2x2
jax: 0.10.0
libtpu: 0.0.40
codegen_flags: <defaults>
</compile_context>

<pallas_src>
import functools

import jax
import jax.numpy as jnp
from jax.experimental import pallas as pl
from jax.experimental.pallas import tpu as pltpu


def _round_up(x: int, m: int) -> int:
    return ((x + m - 1) // m) * m


def mlp_kernel(x_ref, w1_ref, b1_ref, w2_ref, b2_ref, o_ref):
    # First layer on the MXU: (tile_b, n_feats) @ (n_feats, n_hidden), f32 acc.
    h = jnp.dot(x_ref[...], w1_ref[...], preferred_element_type=jnp.float32)
    # Bias + ReLU on the VPU (stays f32 even when x/W1 are bf16).
    h = jnp.maximum(h + b1_ref[...], 0.0)
    # Second layer has a single output unit: VPU multiply + lane (XLU)
    # reduction instead of an N=1 MXU matmul.
    o = jnp.sum(h * w2_ref[...], axis=-1) + b2_ref[0, 0]          # (tile_b,)
    # Lane-dense store: one (1, tile_b) row per grid step (unmasked vst).
    o_ref[...] = o.reshape(1, -1).astype(o_ref.dtype)


def _choose_tile_b(batch: int, n_feats: int, itemsize: int) -> int:
    """Pick the batch tile from a VMEM byte budget (lane padding included)."""
    b_pad = _round_up(batch, 8)
    if b_pad <= 512:
        # Tiny batch: a single grid step; launch overhead dominates anyway.
        return b_pad
    lane_feats = _round_up(n_feats, 128)        # x rows are lane-padded to 128
    target_bytes = 4 * 1024 * 1024              # ~4 MiB per x buffer
    tile_b = max(128, target_bytes // (lane_feats * itemsize))
    # Keep >= ~4 grid steps so the "parallel" batch axis actually shards
    # across both TensorCores on v7x (and the pipeline has depth).
    tile_b = min(tile_b, pl.cdiv(batch, 4))
    # Multiple of 128 so the lane-dense (1, tile_b) output block is unmasked.
    tile_b = max(128, (tile_b // 128) * 128)
    return int(tile_b)


@functools.partial(jax.jit, static_argnames=("use_bf16",))
def regression_model_forward(x, w1, b1, w2_row, b2, *, use_bf16=False):
    """x: (B, n_feats); w1: (n_feats, n_hidden); b1: (1, n_hidden);
    w2_row: (1, n_hidden); b2: (1, 1)  ->  returns (B, 1)."""
    B, n_feats = x.shape
    n_hidden = w1.shape[1]
    out_dtype = x.dtype

    if use_bf16:
        # Halve the dominant HBM stream; MXU still accumulates in f32.
        x = x.astype(jnp.bfloat16)
        w1 = w1.astype(jnp.bfloat16)

    tile_b = _choose_tile_b(B, n_feats, x.dtype.itemsize)
    n_tiles = pl.cdiv(B, tile_b)
    out_cols = n_tiles * tile_b                 # lane-dense output slab width

    # VMEM footprint (double-buffered blocks, lane/sublane padding included).
    lane_feats = _round_up(n_feats, 128)
    lane_hidden = _round_up(n_hidden, 128)
    x_tile_bytes = tile_b * lane_feats * x.dtype.itemsize
    w1_bytes = _round_up(n_feats, 8) * lane_hidden * w1.dtype.itemsize
    o_tile_bytes = 8 * _round_up(tile_b, 128) * jnp.dtype(out_dtype).itemsize
    bias_bytes = 2 * 8 * lane_hidden * 4
    vmem_needed = 2 * (x_tile_bytes + w1_bytes + o_tile_bytes + bias_bytes)
    vmem_limit = int(min(max(2 * vmem_needed, 32 * 1024 * 1024),
                         56 * 1024 * 1024))

    cost = pl.CostEstimate(
        flops=2 * B * n_feats * n_hidden + 4 * B * n_hidden,
        transcendentals=0,
        bytes_accessed=(
            B * n_feats * x.dtype.itemsize
            + w1.size * w1.dtype.itemsize
            + b1.size * b1.dtype.itemsize
            + w2_row.size * w2_row.dtype.itemsize
            + b2.size * b2.dtype.itemsize
            + B * jnp.dtype(out_dtype).itemsize
        ),
    )

    out_row = pl.pallas_call(
        mlp_kernel,
        out_shape=jax.ShapeDtypeStruct((1, out_cols), out_dtype),
        grid=(n_tiles,),
        in_specs=[
            # x: one batch tile per grid step (double-buffered; the ragged
            # last block is fine -- rows are independent, tail sliced away).
            pl.BlockSpec((tile_b, n_feats), lambda i: (i, 0)),
            # Weights / biases: constant index_map -> resident in VMEM.
            pl.BlockSpec((n_feats, n_hidden), lambda i: (0, 0)),
            pl.BlockSpec((1, n_hidden), lambda i: (0, 0)),
            pl.BlockSpec((1, n_hidden), lambda i: (0, 0)),
            # b2 is a single scalar -> SMEM, not an (8,128)-padded VMEM tile.
            pl.BlockSpec(memory_space=pltpu.MemorySpace.SMEM),
        ],
        # Lane-dense output: a (1, tile_b) row per grid step.
        out_specs=pl.BlockSpec((1, tile_b), lambda i: (0, i)),
        compiler_params=pltpu.CompilerParams(
            dimension_semantics=("parallel",),
            vmem_limit_bytes=vmem_limit,
        ),
        cost_estimate=cost,
    )(x, w1, b1, w2_row, b2)

    return out_row[0, :B].reshape(B, 1)


def init_params(key, n_feats, n_hidden, dtype=jnp.float32):
    """Deterministic init mimicking PyTorch nn.Linear default
    (U[-1/sqrt(fan_in), 1/sqrt(fan_in)])."""
    k1, k2, k3, k4 = jax.random.split(key, 4)
    bound1 = 1.0 / jnp.sqrt(n_feats)
    bound2 = 1.0 / jnp.sqrt(n_hidden)
    w1 = jax.random.uniform(k1, (n_feats, n_hidden), dtype, -bound1, bound1)
    b1 = jax.random.uniform(k2, (1, n_hidden), dtype, -bound1, bound1)
    # logstic2.weight in PyTorch is (1, n_hidden): keep it as a row vector.
    w2_row = jax.random.uniform(k3, (1, n_hidden), dtype, -bound2, bound2)
    b2 = jax.random.uniform(k4, (1, 1), dtype, -bound2, bound2)
    return w1, b1, w2_row, b2


def _reference(x, w1, b1, w2_row, b2):
    # PyTorch forward semantics: Linear -> ReLU -> Linear (W2 is (1, n_hidden)).
    return jnp.maximum(x @ w1 + b1, 0.0) @ w2_row.T + b2


if __name__ == "__main__":
    # --- Test 1: tiny single-tile case (matches the module's demo sizes). ---
    batch, n_feats, n_hidden = 8, 32, 32
    key = jax.random.PRNGKey(0)
    kx, kp, kx2, kp2 = jax.random.split(key, 4)
    x = jax.random.normal(kx, (batch, n_feats), dtype=jnp.float32)
    params = init_params(kp, n_feats, n_hidden)

    out = jax.block_until_ready(regression_model_forward(x, *params))
    ref = _reference(x, *params)
    assert out.shape == (batch, 1)
    assert jnp.allclose(out, ref, atol=1e-5, rtol=1e-5)

    # --- Test 2: multi-tile, ragged batch (exercises lane-dense slab path). ---
    b2_, f2_, h2_ = 777, 24, 48
    x2 = jax.random.normal(kx2, (b2_, f2_), dtype=jnp.float32)
    params2 = init_params(kp2, f2_, h2_)
    out2 = jax.block_until_ready(regression_model_forward(x2, *params2))
    ref2 = _reference(x2, *params2)
    assert out2.shape == (b2_, 1)
    assert jnp.allclose(out2, ref2, atol=1e-4, rtol=1e-4)

    # --- Test 3: bf16 input/weight stream (f32 accumulation / epilogue). ---
    out_bf16 = jax.block_until_ready(
        regression_model_forward(x, *params, use_bf16=True))
    assert out_bf16.shape == (batch, 1)
    assert jnp.allclose(out_bf16, ref, atol=2e-2, rtol=2e-2)

    print("KERNEL_OK")
</pallas_src>

<mosaic_0001>
module attributes {stable_mosaic.version = 11 : i64} {
  func.func @mlp_kernel(%arg0: i32, %arg1: memref<8x32xf32, #tpu.memory_space<vmem>>, %arg2: memref<32x32xf32, #tpu.memory_space<vmem>>, %arg3: memref<1x32xf32, #tpu.memory_space<vmem>>, %arg4: memref<1x32xf32, #tpu.memory_space<vmem>>, %arg5: memref<1x1xf32, #tpu.memory_space<smem>>, %arg6: memref<1x8xf32, #tpu.memory_space<vmem>>) attributes {dimension_semantics = [#tpu.dimension_semantics<parallel>], iteration_bounds = array<i64: 1>, scalar_prefetch = 0 : i64, scratch_operands = 0 : i64, tpu.core_type = #tpu.core_type<tc>, window_params = [{transform_indices = @transform_0, window_bounds = array<i64: 8, 32>}, {pipeline_mode = #tpu.pipeline_mode<synchronous>, transform_indices = @transform_1, window_bounds = array<i64: 32, 32>}, {pipeline_mode = #tpu.pipeline_mode<synchronous>, transform_indices = @transform_2, window_bounds = array<i64: 1, 32>}, {pipeline_mode = #tpu.pipeline_mode<synchronous>, transform_indices = @transform_3, window_bounds = array<i64: 1, 32>}, {transform_indices = @transform_4, window_bounds = array<i64: 1, 1>}, {transform_indices = @transform_5, window_bounds = array<i64: 1, 8>}]} {
    %c0 = arith.constant 0 : index
    %c0_0 = arith.constant 0 : index
    %0 = vector.load %arg1[%c0, %c0_0] : memref<8x32xf32, #tpu.memory_space<vmem>>, vector<8x32xf32>
    %c0_1 = arith.constant 0 : index
    %c0_2 = arith.constant 0 : index
    %1 = vector.load %arg2[%c0_1, %c0_2] : memref<32x32xf32, #tpu.memory_space<vmem>>, vector<32x32xf32>
    %cst = arith.constant dense<0.000000e+00> : vector<8x32xf32>
    %2 = tpu.matmul %0, %1, %cst {dimension_numbers = #tpu.dot_dimension_numbers<[1], [0], [0], [1], [0, 0, 1, 1], [], []>} : vector<8x32xf32>, vector<32x32xf32>, vector<8x32xf32> -> vector<8x32xf32>
    %c0_3 = arith.constant 0 : index
    %c0_4 = arith.constant 0 : index
    %3 = vector.load %arg3[%c0_3, %c0_4] : memref<1x32xf32, #tpu.memory_space<vmem>>, vector<1x32xf32>
    %4 = vector.broadcast %3 : vector<1x32xf32> to vector<8x32xf32>
    %5 = arith.addf %2, %4 : vector<8x32xf32>
    %cst_5 = arith.constant 0.000000e+00 : f32
    %6 = vector.broadcast %cst_5 : f32 to vector<8x32xf32>
    %7 = arith.maximumf %5, %6 : vector<8x32xf32>
    %c0_6 = arith.constant 0 : index
    %c0_7 = arith.constant 0 : index
    %8 = vector.load %arg4[%c0_6, %c0_7] : memref<1x32xf32, #tpu.memory_space<vmem>>, vector<1x32xf32>
    %9 = vector.broadcast %8 : vector<1x32xf32> to vector<8x32xf32>
    %10 = arith.mulf %7, %9 : vector<8x32xf32>
    %cst_8 = arith.constant dense<0.000000e+00> : vector<8xf32>
    %11 = vector.multi_reduction <add>, %10, %cst_8 [1] : vector<8x32xf32> to vector<8xf32>
    %c0_9 = arith.constant 0 : index
    %c0_10 = arith.constant 0 : index
    %12 = memref.load %arg5[%c0_9, %c0_10] : memref<1x1xf32, #tpu.memory_space<smem>>
    %13 = vector.broadcast %12 : f32 to vector<8xf32>
    %14 = arith.addf %11, %13 : vector<8xf32>
    %15 = vector.shape_cast %14 : vector<8xf32> to vector<1x8xf32>
    %c0_11 = arith.constant 0 : index
    %c0_12 = arith.constant 0 : index
    %16 = vector.load %arg6[%c0_11, %c0_12] : memref<1x8xf32, #tpu.memory_space<vmem>>, vector<1x8xf32>
    tpu.vector_store %arg6[%c0_11, %c0_12], %15 {strides = array<i32>} : memref<1x8xf32, #tpu.memory_space<vmem>>, vector<1x8xf32>,
    return
  }
  func.func @transform_0(%arg0: i32) -> (i32, i32) {
    %c0_i32 = arith.constant 0 : i32
    %c0_i32_0 = arith.constant 0 : i32
    return %arg0, %c0_i32 : i32, i32
  }
  func.func @transform_1(%arg0: i32) -> (i32, i32) {
    %c0_i32 = arith.constant 0 : i32
    %c0_i32_0 = arith.constant 0 : i32
    %c0_i32_1 = arith.constant 0 : i32
    return %c0_i32, %c0_i32_0 : i32, i32
  }
  func.func @transform_2(%arg0: i32) -> (i32, i32) {
    %c0_i32 = arith.constant 0 : i32
    %c0_i32_0 = arith.constant 0 : i32
    %c0_i32_1 = arith.constant 0 : i32
    return %c0_i32, %c0_i32_0 : i32, i32
  }
  func.func @transform_3(%arg0: i32) -> (i32, i32) {
    %c0_i32 = arith.constant 0 : i32
    %c0_i32_0 = arith.constant 0 : i32
    %c0_i32_1 = arith.constant 0 : i32
    return %c0_i32, %c0_i32_0 : i32, i32
  }
  func.func @transform_4(%arg0: i32) -> (i32, i32) {
    %c0_i32 = arith.constant 0 : i32
    %c0_i32_0 = arith.constant 0 : i32
    %c0_i32_1 = arith.constant 0 : i32
    return %c0_i32, %c0_i32_0 : i32, i32
  }
  func.func @transform_5(%arg0: i32) -> (i32, i32) {
    %c0_i32 = arith.constant 0 : i32
    %c0_i32_0 = arith.constant 0 : i32
    return %c0_i32, %arg0 : i32, i32
  }
}

</mosaic_0001>

<llo_original>
// kernel: regression_model_forward.1
$region0: #{regression_model_forward.1}
  #allocation0 [shape = 'u32[]', space=smem, size = 0x4, offset = 0x4, fixed_abs, tag = 'smem constant byte address 0x4 - core index']
  #allocation1 [shape = 'u32[72,128]{1,0:T(1,128)}', space=vmem, size = 0x9000, scoped, tag = 'internal scratch']
  #allocation2 [shape = 'f32[1,1]{1,0:T(1,128)S(6)}', space=smem, size = 0x200, scoped, tag = 'scoped memory for regression_model_forward.1']
  %s0 = inlined_call_operand.hbm [shape: f32[8,32], index: 0, kind: input, shape index: {}]
  %s1 = inlined_call_operand.hbm [shape: f32[32,32], index: 1, kind: input, shape index: {}]
  %s2 = inlined_call_operand.vmem [shape: f32[1,32], index: 2, kind: input, shape index: {}]
  %s3 = inlined_call_operand.vmem [shape: f32[1,32], index: 3, kind: input, shape index: {}]
  %s4 = inlined_call_operand.<no memory space> [shape: f32[1,1], index: 4, kind: input, shape index: {}]
  %s5 = inlined_call_operand.hbm [shape: f32[1,8], index: 5, kind: output, shape index: {}]
  %s6 = sld [smem:[#allocation0]]
  $region38: #{regression_model_forward.1} parent=0
    _
  %s8 = ssub.s32 1, %s6
  %s9 = scalar_select 0, %s8, %s6
  %10 = sst [smem:[#allocation2]] %s4
  $region1: #{regression_model_forward.1} parent=0
    #allocation3 [shape = 'u8[4096]{0}', space=vmem, size = 0x1000, scoped, tag = 'input window, operand 0, single buffered']
    #allocation4 [shape = 's32[1]{0}', space=sflag, size = 0x4, scoped, tag = 'scoped memory for regression_model_forward.1']
    #allocation5 [shape = 's32[1]{0}', space=sflag, size = 0x4, scoped, tag = 'scoped memory for regression_model_forward.1']
    #allocation6 [shape = 'u8[16384]{0}', space=vmem, size = 0x4000, scoped, tag = 'input window, operand 1, single buffered']
    #allocation7 [shape = 's32[1]{0}', space=sflag, size = 0x4, scoped, tag = 'scoped memory for regression_model_forward.1']
    #allocation8 [shape = 'u8[512]{0}', space=vmem, size = 0x400, scoped, tag = 'output window, operand 0, single buffered']
    %11 = vsyncpa [#allocation4], 0
    %12 = vsyncpa [#allocation7], 0
    %13 = vsyncpa [#allocation5], 0
    // Predicated region
    $region2: #{regression_model_forward.1} parent=1 // pred_check
      _
    $region3: #{regression_model_forward.1} parent=1 // pred_check_branch
      %15 = sbr.rel (0) target = $region5
    $region4: #{regression_model_forward.1} parent=1 // pred_region
      %17 = vsyncadd [#allocation4], 0
      %s19 = sshll.u32 %s0, 4
      %s20 = int_to_ptr.hbm [resolvable:$true] %s19
      %s21 = sshll.u32 [#allocation3], 4
      %s22 = int_to_ptr.vmem [resolvable:$true] %s21
      %24 = dma.hbm_to_vmem [thread:$0]  %s20, 128, %s22, [#allocation4]
    $region5: #{regression_model_forward.1} parent=1 // pred_fallthru
      _
    // Predicated region
    $region6: #{regression_model_forward.1} parent=1 // pred_check
      _
    $region7: #{regression_model_forward.1} parent=1 // pred_check_branch
      %26 = sbr.rel (0) target = $region9
    $region8: #{regression_model_forward.1} parent=1 // pred_region
      %28 = vsyncadd [#allocation7], 0
      %s29 = sshll.u32 %s1, 4
      %s30 = int_to_ptr.hbm [resolvable:$true] %s29
      %s31 = sshll.u32 [#allocation6], 4
      %s32 = int_to_ptr.vmem [resolvable:$true] %s31
      %37 = dma.hbm_to_vmem [thread:$0]  %s30, 512, %s32, [#allocation7], 128, 128, 8
    $region9: #{regression_model_forward.1} parent=1 // pred_fallthru
      _
    // Predicated region
    $region10: #{regression_model_forward.1} parent=1 // pred_check
      _
    $region11: #{regression_model_forward.1} parent=1 // pred_check_branch
      %39 = sbr.rel (0) target = $region13
    $region12: #{regression_model_forward.1} parent=1 // pred_region
      _
    $region13: #{regression_model_forward.1} parent=1 // pred_fallthru
      _
    // Predicated region
    $region14: #{regression_model_forward.1} parent=1 // pred_check
      _
    $region15: #{regression_model_forward.1} parent=1 // pred_check_branch
      %41 = sbr.rel (0) target = $region17
    $region16: #{regression_model_forward.1} parent=1 // pred_region
      _
    $region17: #{regression_model_forward.1} parent=1 // pred_fallthru
      _
    // Predicated region
    $region18: #{regression_model_forward.1} parent=1 // pred_check
      _
    $region19: #{regression_model_forward.1} parent=1 // pred_check_branch
      %43 = sbr.rel (0) target = $region21
    $region20: #{regression_model_forward.1} parent=1 // pred_region
      _
    $region21: #{regression_model_forward.1} parent=1 // pred_fallthru
      _
    // Predicated region
    $region22: #{regression_model_forward.1} parent=1 // pred_check
      _
    $region23: #{regression_model_forward.1} parent=1 // pred_check_branch
      %45 = sbr.rel (0) target = $region25
    $region24: #{regression_model_forward.1} parent=1 // pred_region
      %47 = dma.done [#allocation4], 128
    $region25: #{regression_model_forward.1} parent=1 // pred_fallthru
      _
    // Predicated region
    $region26: #{regression_model_forward.1} parent=1 // pred_check
      _
    $region27: #{regression_model_forward.1} parent=1 // pred_check_branch
      %49 = sbr.rel (0) target = $region29
    $region28: #{regression_model_forward.1} parent=1 // pred_region
      %51 = dma.done [#allocation7], 512
    $region29: #{regression_model_forward.1} parent=1 // pred_fallthru
      _
    %v52 = vld [vmem:[#allocation3] sm:$0xff]
    %v53 = vld [vmem:[#allocation6] sm:$0xff]
    %v54 = vld [vmem:[#allocation6 + $0x8] sm:$0xff]
    %v55 = vld [vmem:[#allocation6 + $0x10] sm:$0xff]
    %v56 = vld [vmem:[#allocation6 + $0x18] sm:$0xff]
    %v57 = vld [vmem:[%s2] sm:$0x1]
    %v59 = vperm.slane %v57, 0
    %vm61 = vcmask 261120
    %v63 = vsel %vm61, %v52, 0
    %65 = vmatpush.msra.mxu0 0.0
    %66 = vmatpush.msra.mxu0 0.0
    %67 = vmatpush.msra.mxu0 0.0
    %68 = vmatpush.msra.mxu0 0.0
    %69 = vmatpush.msra.mxu0 0.0
    %70 = vmatpush.msra.mxu0 0.0
    %71 = vmatpush.msra.mxu0 0.0
    %72 = vmatpush.msra.mxu0 0.0
    %73 = vmatpush.msra.mxu0 0.0
    %74 = vmatpush.msra.mxu0 0.0
    %75 = vmatpush.msra.mxu0 0.0
    %76 = vmatpush.msra.mxu0 0.0
    %77 = vmatpush.msra.mxu0 %v56
    %78 = vmatpush.msra.mxu0 %v55
    %79 = vmatpush.msra.mxu0 %v54
    %80 = vmatpush.msra.mxu0 %v53
    %81 = vmatmul.f32.gmra.mxu0 %v63
    %v82 = vpop.f32.mrf.mxu0
    %v83 = vadd.f32 %v59, %v82
    %84 = vdwg.mxu0
    %v85 = vmax.f32 %v83, 0.0
    %v86 = vld [vmem:[%s3] sm:$0x1]
    %v88 = vperm.slane %v86, 0
    %v90 = vmul.f32 %v85, %v88
    %v91 = vsel %vm61, %v90, 0.0
    %92 = vadd.xlane.f32.xlu0 %v91
    %v93 = vpop.xlane.xlu0 %92
    %s94 = sld [smem:[#allocation2]]
    %v95 = vstv %s94
    %v96 = vadd.f32 %v93, %v95
    %v98 = vlaneseq
    %v99 = vand.u32 %v98, 127
    %v100 = vperm.slane %v96, %v99
    %vm102 = vcmask 57344
    %103 = vst.msk [vmem:[#allocation8] sm:$0x1] %vm102, %v100
    // Predicated region
    $region30: #{regression_model_forward.1} parent=1 // pred_check
      _
    $region31: #{regression_model_forward.1} parent=1 // pred_check_branch
      %105 = sbr.rel (0) target = $region33
    $region32: #{regression_model_forward.1} parent=1 // pred_region
      %107 = vsyncadd [#allocation5], 0
      %s109 = sshll.u32 [#allocation8], 4
      %s110 = int_to_ptr.vmem [resolvable:$true] %s109
      %s111 = sshll.u32 %s5, 4
      %s112 = int_to_ptr.hbm [resolvable:$true] %s111
      %114 = dma.vmem_to_hbm [thread:$0]  %s110, 16, %s112, [#allocation5]
    $region33: #{regression_model_forward.1} parent=1 // pred_fallthru
      _
    // Predicated region
    $region34: #{regression_model_forward.1} parent=1 // pred_check
      _
    $region35: #{regression_model_forward.1} parent=1 // pred_check_branch
      %116 = sbr.rel (0) target = $region37
    $region36: #{regression_model_forward.1} parent=1 // pred_region
      %118 = dma.done [#allocation5], 16
    $region37: #{regression_model_forward.1} parent=1 // pred_fallthru
      _
    %119 = vsyncpa [#allocation4], 1
    %120 = vsyncpa [#allocation7], 1
    %121 = vsyncpa [#allocation5], 1

</llo_original>
